<compile_context>
chip_gen: v5e
topology: v5e:2x2
jax: 0.10.0
libtpu: 0.0.40
codegen_flags: <defaults>
</compile_context>

<pallas_src>
import jax
import jax.numpy as jnp
from jax import lax
from jax.experimental import pallas as pl
from jax.experimental.pallas import tpu as pltpu


def _mlp_kernel(x_ref, w1_ref, b1_ref, w2_ref, b2_ref, ot_ref):
    # x_ref: [TB, I] f32 (natural layout); w1_ref: [H, I] bf16.
    x_b = x_ref[...].astype(jnp.bfloat16)
    # fc1, transposed result: h[h, b] = sum_i w1[h, i] * x[b, i]  -> [H, TB]
    # (MXU, bf16 feeds, f32 accumulation; no in-kernel transpose needed.)
    h = lax.dot_general(
        w1_ref[...], x_b,
        dimension_numbers=(((1,), (1,)), ((), ())),
        preferred_element_type=jnp.float32)
    h = h + b1_ref[...]            # [H, 1] broadcasts along lanes (batch)
    h = jnp.maximum(h, 0.0)        # ReLU (f32, VPU)
    # TODO(synk): training-mode dropout (pltpu.prng_seed/prng_random_bits mask
    # with 1/(1-p) scaling); eval-mode nn.Dropout is the identity.
    # fc2 (O == 1): VPU multiply + cross-sublane reduce -> lane-dense [1, TB].
    out_t = jnp.sum(h * w2_ref[...], axis=0, keepdims=True)
    ot_ref[...] = (out_t + b2_ref[0, 0]).astype(ot_ref.dtype)


def _pick_batch_tile(B, I):
    """Batch-tile (sublane) size for the streamed x block."""
    if B <= 1024:
        return B                                    # single grid step
    itemsize = 4                                    # x streamed as f32
    lane_pad = pl.cdiv(I, 128) * 128                # VMEM lanes pad to 128
    # x block is double-buffered; keep its VMEM footprint <= ~16 MiB
    # (safe on v7x's 64 MiB physical VMEM and well under the 48 MiB limit set
    #  below; v5e/v6e have 128 MiB physical).
    tb_vmem = (16 << 20) // (2 * lane_pad * itemsize)
    # Aim for ~2 MiB of useful HBM traffic per grid step (amortize ~0.35 us/step).
    tb_dma = (2 << 20) // (I * itemsize)
    tb = max(128, (min(tb_vmem, tb_dma) // 128) * 128)
    # Keep >= 2 grid steps so v7x megacore can split the batch across both TCs.
    half = pl.cdiv(pl.cdiv(B, 2), 128) * 128
    return min(tb, half)


def usage_predictor_forward(x, w1, b1, w2, b2, *, force_pallas=False):
    """Forward pass of UsagePredictor.

    x : [B, I] float32 (natural layout, no wrapper transpose/cast)
    w1: [H, I] bfloat16 (PyTorch nn.Linear layout, pre-cast for the MXU)
    b1: [H, 1] float32
    w2: [H, 1] float32 (fc2 weight as a column)
    b2: [1, 1] float32
    returns [B, 1] float32
    """
    B, I = x.shape
    H = w1.shape[0]
    O = w2.shape[1]
    assert O == 1, "reduction-based fc2 assumes output_size == 1"

    x = x.astype(jnp.float32)
    w1 = w1.astype(jnp.bfloat16)   # no-op when already stored as bf16

    if B < 512 and not force_pallas:
        # Tiny batch: pallas_call fixed overhead dominates -> plain XLA path
        # (same bf16 MXU feed / f32 accumulation semantics).
        h = lax.dot_general(x.astype(jnp.bfloat16), w1,
                            (((1,), (1,)), ((), ())),
                            preferred_element_type=jnp.float32)
        h = jnp.maximum(h + b1.reshape(1, H), 0.0)
        return (jnp.sum(h * w2.reshape(1, H), axis=-1, keepdims=True)
                + b2.reshape(1, O)).astype(jnp.float32)

    TB = _pick_batch_tile(B, I)
    grid = (pl.cdiv(B, TB),)

    cost = pl.CostEstimate(
        flops=2 * B * I * H + 2 * B * H,
        transcendentals=0,
        bytes_accessed=B * I * 4 + H * I * 2 + H * 4 + H * O * 4 + O * 4 + B * O * 4,
    )

    out_t = pl.pallas_call(
        _mlp_kernel,
        out_shape=jax.ShapeDtypeStruct((O, B), jnp.float32),
        grid=grid,
        in_specs=[
            # x: streamed over the batch in its natural [B, I] layout.
            # (If steps stay small, pipeline_mode=pl.Buffered(3) here is a
            #  cheap knob to sweep.)
            pl.BlockSpec((TB, I), lambda i: (i, 0)),
            pl.BlockSpec((H, I), lambda i: (0, 0)),    # w1 (bf16): VMEM-resident
            pl.BlockSpec((H, 1), lambda i: (0, 0)),    # b1: VMEM-resident
            pl.BlockSpec((H, O), lambda i: (0, 0)),    # w2: VMEM-resident
            pl.BlockSpec(memory_space=pltpu.MemorySpace.SMEM),  # b2: SMEM scalar
        ],
        out_specs=pl.BlockSpec((O, TB), lambda i: (0, i)),      # lane-dense [1, TB]
        compiler_params=pltpu.CompilerParams(
            dimension_semantics=("parallel",),        # megacore split on v7x
            vmem_limit_bytes=48 * 1024 * 1024,        # raise v5e's 16 MiB default,
                                                      # stay under v7x's 64 MiB phys
        ),
        cost_estimate=cost,
    )(x, w1, b1, w2, b2)

    # [1, B] -> [B, 1] (pure reshape: same contiguous bytes, effectively free).
    return out_t.reshape(B, O)


def init_params(key, input_size, hidden_size, output_size=1):
    """Deterministic synthetic params in the layouts/dtypes the kernel expects."""
    k1, k2, k3, k4 = jax.random.split(key, 4)
    # Match nn.Linear's uniform(-1/sqrt(fan_in), 1/sqrt(fan_in)) init scale.
    s1 = 1.0 / jnp.sqrt(input_size)
    s2 = 1.0 / jnp.sqrt(hidden_size)
    w1 = jax.random.uniform(k1, (hidden_size, input_size), jnp.float32, -s1, s1)
    b1 = jax.random.uniform(k2, (hidden_size, 1), jnp.float32, -s1, s1)
    w2 = jax.random.uniform(k3, (hidden_size, output_size), jnp.float32, -s2, s2)
    b2 = jax.random.uniform(k4, (1, output_size), jnp.float32, -s2, s2)
    # Store w1 in bf16 once so the hot path never re-casts it.
    return w1.astype(jnp.bfloat16), b1, w2, b2


if __name__ == "__main__":
    batch = 256
    input_size = 16
    hidden_size = 32
    output_size = 1

    key = jax.random.PRNGKey(0)
    kx, kp = jax.random.split(key)
    x = jax.random.normal(kx, (batch, input_size), jnp.float32)
    w1, b1, w2, b2 = init_params(kp, input_size, hidden_size, output_size)

    # Force the Pallas path so the kernel itself is exercised at demo size.
    out = usage_predictor_forward(x, w1, b1, w2, b2, force_pallas=True)
    out = jax.block_until_ready(out)

    # Pure-JAX reference (same bf16 MXU feed / f32 accumulation as the kernel;
    # eval-mode dropout == identity).
    h_ref = lax.dot_general(x.astype(jnp.bfloat16), w1,
                            (((1,), (1,)), ((), ())),
                            preferred_element_type=jnp.float32)
    h_ref = jnp.maximum(h_ref + b1.reshape(1, -1), 0.0)
    ref = (jnp.sum(h_ref * w2.reshape(1, -1), axis=-1, keepdims=True)
           + b2.reshape(1, 1))

    assert out.shape == (batch, output_size)
    assert jnp.allclose(out, ref, atol=1e-3, rtol=1e-3)

    print("KERNEL_OK")
</pallas_src>

<mosaic_0001>
module attributes {stable_mosaic.version = 11 : i64} {
  func.func @_mlp_kernel(%arg0: i32, %arg1: memref<256x16xf32, #tpu.memory_space<vmem>>, %arg2: memref<32x16xbf16, #tpu.memory_space<vmem>>, %arg3: memref<32x1xf32, #tpu.memory_space<vmem>>, %arg4: memref<32x1xf32, #tpu.memory_space<vmem>>, %arg5: memref<1x1xf32, #tpu.memory_space<smem>>, %arg6: memref<1x256xf32, #tpu.memory_space<vmem>>) attributes {dimension_semantics = [#tpu.dimension_semantics<parallel>], iteration_bounds = array<i64: 1>, scalar_prefetch = 0 : i64, scratch_operands = 0 : i64, tpu.core_type = #tpu.core_type<tc>, window_params = [{transform_indices = @transform_0, window_bounds = array<i64: 256, 16>}, {pipeline_mode = #tpu.pipeline_mode<synchronous>, transform_indices = @transform_1, window_bounds = array<i64: 32, 16>}, {pipeline_mode = #tpu.pipeline_mode<synchronous>, transform_indices = @transform_2, window_bounds = array<i64: 32, 1>}, {pipeline_mode = #tpu.pipeline_mode<synchronous>, transform_indices = @transform_3, window_bounds = array<i64: 32, 1>}, {transform_indices = @transform_4, window_bounds = array<i64: 1, 1>}, {transform_indices = @transform_5, window_bounds = array<i64: 1, 256>}]} {
    %c0 = arith.constant 0 : index
    %c0_0 = arith.constant 0 : index
    %0 = vector.load %arg1[%c0, %c0_0] : memref<256x16xf32, #tpu.memory_space<vmem>>, vector<256x16xf32>
    %1 = arith.truncf %0 : vector<256x16xf32> to vector<256x16xbf16>
    %c0_1 = arith.constant 0 : index
    %c0_2 = arith.constant 0 : index
    %2 = vector.load %arg2[%c0_1, %c0_2] : memref<32x16xbf16, #tpu.memory_space<vmem>>, vector<32x16xbf16>
    %cst = arith.constant dense<0.000000e+00> : vector<32x256xf32>
    %3 = tpu.matmul %2, %1, %cst {dimension_numbers = #tpu.dot_dimension_numbers<[1], [1], [0], [0], [0, 0, 1, 0], [], []>} : vector<32x16xbf16>, vector<256x16xbf16>, vector<32x256xf32> -> vector<32x256xf32>
    %c0_3 = arith.constant 0 : index
    %c0_4 = arith.constant 0 : index
    %4 = vector.load %arg3[%c0_3, %c0_4] : memref<32x1xf32, #tpu.memory_space<vmem>>, vector<32x1xf32>
    %5 = vector.broadcast %4 : vector<32x1xf32> to vector<32x256xf32>
    %6 = arith.addf %3, %5 : vector<32x256xf32>
    %cst_5 = arith.constant 0.000000e+00 : f32
    %7 = vector.broadcast %cst_5 : f32 to vector<32x256xf32>
    %8 = arith.maximumf %6, %7 : vector<32x256xf32>
    %c0_6 = arith.constant 0 : index
    %c0_7 = arith.constant 0 : index
    %9 = vector.load %arg4[%c0_6, %c0_7] : memref<32x1xf32, #tpu.memory_space<vmem>>, vector<32x1xf32>
    %10 = vector.broadcast %9 : vector<32x1xf32> to vector<32x256xf32>
    %11 = arith.mulf %8, %10 : vector<32x256xf32>
    %cst_8 = arith.constant dense<0.000000e+00> : vector<256xf32>
    %12 = vector.multi_reduction <add>, %11, %cst_8 [0] : vector<32x256xf32> to vector<256xf32>
    %13 = vector.shape_cast %12 : vector<256xf32> to vector<1x256xf32>
    %c0_9 = arith.constant 0 : index
    %c0_10 = arith.constant 0 : index
    %14 = memref.load %arg5[%c0_9, %c0_10] : memref<1x1xf32, #tpu.memory_space<smem>>
    %15 = vector.broadcast %14 : f32 to vector<1x256xf32>
    %16 = arith.addf %13, %15 : vector<1x256xf32>
    %c0_11 = arith.constant 0 : index
    %c0_12 = arith.constant 0 : index
    %17 = vector.load %arg6[%c0_11, %c0_12] : memref<1x256xf32, #tpu.memory_space<vmem>>, vector<1x256xf32>
    tpu.vector_store %arg6[%c0_11, %c0_12], %16 {strides = array<i32>} : memref<1x256xf32, #tpu.memory_space<vmem>>, vector<1x256xf32>,
    return
  }
  func.func @transform_0(%arg0: i32) -> (i32, i32) {
    %c0_i32 = arith.constant 0 : i32
    %c0_i32_0 = arith.constant 0 : i32
    return %arg0, %c0_i32 : i32, i32
  }
  func.func @transform_1(%arg0: i32) -> (i32, i32) {
    %c0_i32 = arith.constant 0 : i32
    %c0_i32_0 = arith.constant 0 : i32
    %c0_i32_1 = arith.constant 0 : i32
    return %c0_i32, %c0_i32_0 : i32, i32
  }
  func.func @transform_2(%arg0: i32) -> (i32, i32) {
    %c0_i32 = arith.constant 0 : i32
    %c0_i32_0 = arith.constant 0 : i32
    %c0_i32_1 = arith.constant 0 : i32
    return %c0_i32, %c0_i32_0 : i32, i32
  }
  func.func @transform_3(%arg0: i32) -> (i32, i32) {
    %c0_i32 = arith.constant 0 : i32
    %c0_i32_0 = arith.constant 0 : i32
    %c0_i32_1 = arith.constant 0 : i32
    return %c0_i32, %c0_i32_0 : i32, i32
  }
  func.func @transform_4(%arg0: i32) -> (i32, i32) {
    %c0_i32 = arith.constant 0 : i32
    %c0_i32_0 = arith.constant 0 : i32
    %c0_i32_1 = arith.constant 0 : i32
    return %c0_i32, %c0_i32_0 : i32, i32
  }
  func.func @transform_5(%arg0: i32) -> (i32, i32) {
    %c0_i32 = arith.constant 0 : i32
    %c0_i32_0 = arith.constant 0 : i32
    return %c0_i32, %arg0 : i32, i32
  }
}

</mosaic_0001>

<llo_original>
// kernel: tpu_custom_call.1
$region0: #{tpu_custom_call.1}
  #allocation0 [shape = 'u32[]', space=smem, size = 0x4, offset = 0x4, fixed_abs, tag = 'smem constant byte address 0x4 - core index']
  #allocation1 [shape = 'u32[72,128]{1,0:T(1,128)}', space=vmem, size = 0x9000, scoped, tag = 'internal scratch']
  #allocation2 [shape = 'f32[1,1]{1,0:T(1,128)S(6)}', space=smem, size = 0x200, scoped, tag = 'scoped memory for tpu_custom_call.1']
  %s0 = inlined_call_operand.vmem [shape: f32[256,16], index: 0, kind: input, shape index: {}]
  %s1 = inlined_call_operand.vmem [shape: bf16[32,16], index: 1, kind: input, shape index: {}]
  %s2 = inlined_call_operand.vmem [shape: f32[32,1], index: 2, kind: input, shape index: {}]
  %s3 = inlined_call_operand.vmem [shape: f32[32,1], index: 3, kind: input, shape index: {}]
  %s4 = inlined_call_operand.<no memory space> [shape: f32[1,1], index: 4, kind: input, shape index: {}]
  %s5 = inlined_call_operand.hbm [shape: f32[1,256], index: 5, kind: output, shape index: {}]
  %s6 = sld [smem:[#allocation0]]
  $region30: #{tpu_custom_call.1} parent=0
    _
  %s8 = ssub.s32 1, %s6
  %s9 = scalar_select 0, %s8, %s6
  %10 = sst [smem:[#allocation2]] %s4
  $region1: #{tpu_custom_call.1} parent=0
    #allocation3 [shape = 'u8[1024]{0}', space=vmem, size = 0x400, scoped, tag = 'output window, operand 0, single buffered']
    #allocation4 [shape = 's32[1]{0}', space=sflag, size = 0x4, scoped, tag = 'scoped memory for tpu_custom_call.1']
    %11 = vsyncpa [#allocation4], 0
    // Predicated region
    $region2: #{tpu_custom_call.1} parent=1 // pred_check
      _
    $region3: #{tpu_custom_call.1} parent=1 // pred_check_branch
      %13 = sbr.rel (0) target = $region5
    $region4: #{tpu_custom_call.1} parent=1 // pred_region
      _
    $region5: #{tpu_custom_call.1} parent=1 // pred_fallthru
      _
    // Predicated region
    $region6: #{tpu_custom_call.1} parent=1 // pred_check
      _
    $region7: #{tpu_custom_call.1} parent=1 // pred_check_branch
      %15 = sbr.rel (0) target = $region9
    $region8: #{tpu_custom_call.1} parent=1 // pred_region
      _
    $region9: #{tpu_custom_call.1} parent=1 // pred_fallthru
      _
    // Predicated region
    $region10: #{tpu_custom_call.1} parent=1 // pred_check
      _
    $region11: #{tpu_custom_call.1} parent=1 // pred_check_branch
      %17 = sbr.rel (0) target = $region13
    $region12: #{tpu_custom_call.1} parent=1 // pred_region
      _
    $region13: #{tpu_custom_call.1} parent=1 // pred_fallthru
      _
    // Predicated region
    $region14: #{tpu_custom_call.1} parent=1 // pred_check
      _
    $region15: #{tpu_custom_call.1} parent=1 // pred_check_branch
      %19 = sbr.rel (0) target = $region17
    $region16: #{tpu_custom_call.1} parent=1 // pred_region
      _
    $region17: #{tpu_custom_call.1} parent=1 // pred_fallthru
      _
    // Predicated region
    $region18: #{tpu_custom_call.1} parent=1 // pred_check
      _
    $region19: #{tpu_custom_call.1} parent=1 // pred_check_branch
      %21 = sbr.rel (0) target = $region21
    $region20: #{tpu_custom_call.1} parent=1 // pred_region
      _
    $region21: #{tpu_custom_call.1} parent=1 // pred_fallthru
      _
    %v22 = vld [vmem:[%s0] sm:$0xff]
    %v23 = vld [vmem:[%s0 + $0x8] sm:$0xff]
    %v24 = vld [vmem:[%s0 + $0x10] sm:$0xff]
    %v25 = vld [vmem:[%s0 + $0x18] sm:$0xff]
    %v26 = vld [vmem:[%s0 + $0x20] sm:$0xff]
    %v27 = vld [vmem:[%s0 + $0x28] sm:$0xff]
    %v28 = vld [vmem:[%s0 + $0x30] sm:$0xff]
    %v29 = vld [vmem:[%s0 + $0x38] sm:$0xff]
    %v30 = vld [vmem:[%s0 + $0x40] sm:$0xff]
    %v31 = vld [vmem:[%s0 + $0x48] sm:$0xff]
    %v32 = vld [vmem:[%s0 + $0x50] sm:$0xff]
    %v33 = vld [vmem:[%s0 + $0x58] sm:$0xff]
    %v34 = vld [vmem:[%s0 + $0x60] sm:$0xff]
    %v35 = vld [vmem:[%s0 + $0x68] sm:$0xff]
    %v36 = vld [vmem:[%s0 + $0x70] sm:$0xff]
    %v37 = vld [vmem:[%s0 + $0x78] sm:$0xff]
    %v38 = vld [vmem:[%s0 + $0x80] sm:$0xff]
    %v39 = vld [vmem:[%s0 + $0x88] sm:$0xff]
    %v40 = vld [vmem:[%s0 + $0x90] sm:$0xff]
    %v41 = vld [vmem:[%s0 + $0x98] sm:$0xff]
    %v42 = vld [vmem:[%s0 + $0xa0] sm:$0xff]
    %v43 = vld [vmem:[%s0 + $0xa8] sm:$0xff]
    %v44 = vld [vmem:[%s0 + $0xb0] sm:$0xff]
    %v45 = vld [vmem:[%s0 + $0xb8] sm:$0xff]
    %v46 = vld [vmem:[%s0 + $0xc0] sm:$0xff]
    %v47 = vld [vmem:[%s0 + $0xc8] sm:$0xff]
    %v48 = vld [vmem:[%s0 + $0xd0] sm:$0xff]
    %v49 = vld [vmem:[%s0 + $0xd8] sm:$0xff]
    %v50 = vld [vmem:[%s0 + $0xe0] sm:$0xff]
    %v51 = vld [vmem:[%s0 + $0xe8] sm:$0xff]
    %v52 = vld [vmem:[%s0 + $0xf0] sm:$0xff]
    %v53 = vld [vmem:[%s0 + $0xf8] sm:$0xff]
    %v54 = vpack.c.bf16 %v23, %v22
    %v55 = vpack.c.bf16 %v25, %v24
    %v56 = vpack.c.bf16 %v27, %v26
    %v57 = vpack.c.bf16 %v29, %v28
    %v58 = vpack.c.bf16 %v31, %v30
    %v59 = vpack.c.bf16 %v33, %v32
    %v60 = vpack.c.bf16 %v35, %v34
    %v61 = vpack.c.bf16 %v37, %v36
    %v62 = vpack.c.bf16 %v39, %v38
    %v63 = vpack.c.bf16 %v41, %v40
    %v64 = vpack.c.bf16 %v43, %v42
    %v65 = vpack.c.bf16 %v45, %v44
    %v66 = vpack.c.bf16 %v47, %v46
    %v67 = vpack.c.bf16 %v49, %v48
    %v68 = vpack.c.bf16 %v51, %v50
    %v69 = vpack.c.bf16 %v53, %v52
    %v70 = vld [vmem:[%s1] sm:$0xf]
    %v71 = vld [vmem:[%s1 + $0x4] sm:$0xf]
    %v72 = vld [vmem:[%s1 + $0x8] sm:$0xf]
    %v73 = vld [vmem:[%s1 + $0xc] sm:$0xf]
    %v74 = vld [vmem:[%s2] sm:$0xff]
    %v75 = vld [vmem:[%s2 + $0x8] sm:$0xff]
    %v76 = vld [vmem:[%s2 + $0x10] sm:$0xff]
    %v77 = vld [vmem:[%s2 + $0x18] sm:$0xff]
    %79 = vset.pattern.permute.xlu0 0
    %80 = vperm.xlu0 %79, %v74
    %v81 = vpop.permute.xlu0 %80
    %84 = vset.pattern.permute.xlu0 0
    %85 = vperm.xlu0 %84, %v75
    %v86 = vpop.permute.xlu0 %85
    %89 = vset.pattern.permute.xlu0 0
    %90 = vperm.xlu0 %89, %v76
    %v91 = vpop.permute.xlu0 %90
    %94 = vset.pattern.permute.xlu0 0
    %95 = vperm.xlu0 %94, %v77
    %v96 = vpop.permute.xlu0 %95
    %v102 = vunpack.c.l.b16 %v70
    %v103 = vunpack.c.l.b16 %v71
    %v104 = vunpack.c.l.b16 %v72
    %v105 = vunpack.c.l.b16 %v73
    %v106 = vpack.c.b16 %v103, %v102
    %v107 = vpack.c.b16 %v105, %v104
    %vm108 = vcmask 130048
    %v110 = vsel %vm108, %v106, 0
    %v113 = vsel %vm108, %v107, 0
    %v116 = vsel %vm108, %v54, 0
    %v119 = vsel %vm108, %v55, 0
    %v122 = vsel %vm108, %v56, 0
    %v125 = vsel %vm108, %v57, 0
    %v128 = vsel %vm108, %v58, 0
    %v131 = vsel %vm108, %v59, 0
    %v134 = vsel %vm108, %v60, 0
    %v137 = vsel %vm108, %v61, 0
    %v140 = vsel %vm108, %v62, 0
    %v143 = vsel %vm108, %v63, 0
    %v146 = vsel %vm108, %v64, 0
    %v149 = vsel %vm108, %v65, 0
    %v152 = vsel %vm108, %v66, 0
    %v155 = vsel %vm108, %v67, 0
    %v158 = vsel %vm108, %v68, 0
    %v161 = vsel %vm108, %v69, 0
    %163 = vmatpush.bf16.xpose.msra.mxu0 %v137
    %164 = vmatpush.bf16.xpose.msra.mxu0 %v134
    %165 = vmatpush.bf16.xpose.msra.mxu0 %v131
    %166 = vmatpush.bf16.xpose.msra.mxu0 %v128
    %167 = vmatpush.bf16.xpose.msra.mxu0 %v125
    %168 = vmatpush.bf16.xpose.msra.mxu0 %v122
    %169 = vmatpush.bf16.xpose.msra.mxu0 %v119
    %170 = vmatpush.bf16.xpose.msra.mxu0 %v116
    %171 = vmatmul.bf16.gmra.mxu0 %v110
    %v172 = vpop.f32.mrf.mxu0
    %v173 = vadd.f32 %v81, %v172
    %v174 = vpop.f32.mrf.mxu0
    %v175 = vadd.f32 %v86, %v174
    %176 = vmatmul.bf16.gmra.mxu0 %v113
    %v177 = vpop.f32.mrf.mxu0
    %v178 = vadd.f32 %v91, %v177
    %v179 = vpop.f32.mrf.mxu0
    %v180 = vadd.f32 %v96, %v179
    %181 = vdwg.mxu0
    %182 = vmatpush.bf16.xpose.msra.mxu0 %v161
    %183 = vmatpush.bf16.xpose.msra.mxu0 %v158
    %184 = vmatpush.bf16.xpose.msra.mxu0 %v155
    %185 = vmatpush.bf16.xpose.msra.mxu0 %v152
    %186 = vmatpush.bf16.xpose.msra.mxu0 %v149
    %187 = vmatpush.bf16.xpose.msra.mxu0 %v146
    %188 = vmatpush.bf16.xpose.msra.mxu0 %v143
    %189 = vmatpush.bf16.xpose.msra.mxu0 %v140
    %190 = vmatmul.bf16.gmra.mxu0 %v110
    %v191 = vpop.f32.mrf.mxu0
    %v192 = vadd.f32 %v81, %v191
    %v193 = vpop.f32.mrf.mxu0
    %v194 = vadd.f32 %v86, %v193
    %195 = vmatmul.bf16.gmra.mxu0 %v113
    %v196 = vpop.f32.mrf.mxu0
    %v197 = vadd.f32 %v91, %v196
    %v198 = vpop.f32.mrf.mxu0
    %v199 = vadd.f32 %v96, %v198
    %200 = vdwg.mxu0
    %v201 = vmax.f32 %v173, 0.0
    %v202 = vmax.f32 %v192, 0.0
    %v203 = vmax.f32 %v175, 0.0
    %v204 = vmax.f32 %v194, 0.0
    %v205 = vmax.f32 %v178, 0.0
    %v206 = vmax.f32 %v197, 0.0
    %v207 = vmax.f32 %v180, 0.0
    %v208 = vmax.f32 %v199, 0.0
    %v209 = vld [vmem:[%s3] sm:$0xff]
    %v210 = vld [vmem:[%s3 + $0x8] sm:$0xff]
    %v211 = vld [vmem:[%s3 + $0x10] sm:$0xff]
    %v212 = vld [vmem:[%s3 + $0x18] sm:$0xff]
    %214 = vset.pattern.permute.xlu0 0
    %215 = vperm.xlu0 %214, %v209
    %v216 = vpop.permute.xlu0 %215
    %219 = vset.pattern.permute.xlu0 0
    %220 = vperm.xlu0 %219, %v210
    %v221 = vpop.permute.xlu0 %220
    %224 = vset.pattern.permute.xlu0 0
    %225 = vperm.xlu0 %224, %v211
    %v226 = vpop.permute.xlu0 %225
    %229 = vset.pattern.permute.xlu0 0
    %230 = vperm.xlu0 %229, %v212
    %v231 = vpop.permute.xlu0 %230
    %v233 = vmul.f32 %v201, %v216
    %v234 = vmul.f32 %v202, %v216
    %v235 = vmul.f32 %v203, %v221
    %v236 = vmul.f32 %v204, %v221
    %v237 = vmul.f32 %v205, %v226
    %v238 = vmul.f32 %v206, %v226
    %v239 = vmul.f32 %v207, %v231
    %v240 = vmul.f32 %v208, %v231
    %v241 = vadd.f32 %v233, %v235
    %v242 = vadd.f32 %v241, %v237
    %v243 = vadd.f32 %v242, %v239
    %v244 = vrot.slane %v243, 4
    %v245 = vadd.f32 %v243, %v244
    %v246 = vrot.slane %v245, 2
    %v247 = vadd.f32 %v245, %v246
    %v248 = vrot.slane %v247, 1
    %v249 = vadd.f32 %v247, %v248
    %v250 = vadd.f32 %v234, %v236
    %v251 = vadd.f32 %v250, %v238
    %v252 = vadd.f32 %v251, %v240
    %v253 = vrot.slane %v252, 4
    %v254 = vadd.f32 %v252, %v253
    %v255 = vrot.slane %v254, 2
    %v256 = vadd.f32 %v254, %v255
    %v257 = vrot.slane %v256, 1
    %v258 = vadd.f32 %v256, %v257
    %s259 = sld [smem:[#allocation2]]
    %v260 = vstv %s259
    %v261 = vadd.f32 %v249, %v260
    %v262 = vadd.f32 %v258, %v260
    %v265 = vrot.slane %v262, 7
    %vm266 = vcmask 1040384
    %v267 = vsel %vm266, %v261, %v265
    %v269 = vlaneseq
    %vm270 = vcmp.ge.s32.totalorder %v269, 0
    %vm271 = vcmp.lt.s32.totalorder %v269, 256
    %vm272 = vmand %vm270, %vm271
    %273 = vst.msk [vmem:[#allocation3] sm:$0x3] %vm272, %v267
    // Predicated region
    $region22: #{tpu_custom_call.1} parent=1 // pred_check
      _
    $region23: #{tpu_custom_call.1} parent=1 // pred_check_branch
      %275 = sbr.rel (0) target = $region25
    $region24: #{tpu_custom_call.1} parent=1 // pred_region
      %277 = vsyncadd [#allocation4], 0
      %s279 = sshll.u32 [#allocation3], 4
      %s280 = int_to_ptr.vmem [resolvable:$true] %s279
      %s281 = sshll.u32 %s5, 4
      %s282 = int_to_ptr.hbm [resolvable:$true] %s281
      %284 = dma.vmem_to_hbm [thread:$0]  %s280, 32, %s282, [#allocation4]
    $region25: #{tpu_custom_call.1} parent=1 // pred_fallthru
      _
    // Predicated region
    $region26: #{tpu_custom_call.1} parent=1 // pred_check
      _
    $region27: #{tpu_custom_call.1} parent=1 // pred_check_branch
      %286 = sbr.rel (0) target = $region29
    $region28: #{tpu_custom_call.1} parent=1 // pred_region
      %288 = dma.done [#allocation4], 32
    $region29: #{tpu_custom_call.1} parent=1 // pred_fallthru
      _
    %289 = vsyncpa [#allocation4], 1

</llo_original>
